<compile_context>
chip_gen: v7x
topology: tpu7x:2x2x1
jax: 0.10.0
libtpu: 0.0.40
codegen_flags: <defaults>
</compile_context>

<pallas_src>
import functools

import jax
import jax.numpy as jnp
from jax import lax
from jax.experimental import pallas as pl
from jax.experimental.pallas import tpu as pltpu

_NEG = -1e30  # Python float (becomes a literal inside the kernel; jnp scalars get captured)


def _round_up(x, m):
    return (x + m - 1) // m * m


def _actor_kernel(seed_ref, obs_ref, *rest, action_dim, use_prng):
    if use_prng:
        (w1_ref, b1_ref, w2_ref, b2_ref, w3_ref, b3_ref, a_ref, logp_ref) = rest
        noise_ref = None
    else:
        (noise_ref, w1_ref, b1_ref, w2_ref, b2_ref, w3_ref, b3_ref,
         a_ref, logp_ref) = rest

    # ---- layer 1 batch-major, straight off the natural-layout f32 obs tile ----
    x = obs_ref[...].astype(jnp.bfloat16)                                  # (TB, obs_dim)
    h1 = jnp.dot(x, w1_ref[...], preferred_element_type=jnp.float32) + b1_ref[...]
    h1 = jnp.maximum(h1, 0.0)                                              # (TB, h1p) f32

    # ---- flip to feature-major: batch sits on the 128-lane axis from here on ----
    h1_t = h1.T.astype(jnp.bfloat16)                                       # (h1p, TB)
    h2 = jnp.dot(w2_ref[...], h1_t, preferred_element_type=jnp.float32) + b2_ref[...]
    h2 = jnp.maximum(h2, 0.0)
    logits = jnp.dot(w3_ref[...], h2.astype(jnp.bfloat16),
                     preferred_element_type=jnp.float32) + b3_ref[...]     # (a_pad, TB)

    a_pad, tb = logits.shape
    row = lax.broadcasted_iota(jnp.int32, (a_pad, tb), 0)                  # action idx / sublane
    logits = jnp.where(row < action_dim, logits, _NEG)                     # mask padded rows

    # ---- Gumbel noise ----
    if use_prng:
        pltpu.prng_seed(seed_ref[0], pl.program_id(0))                     # decorrelated per tile
        raw = pltpu.bitcast(pltpu.prng_random_bits((a_pad, tb)), jnp.int32)
        mant = raw & ((1 << 23) - 1)                                       # 23 uniform bits
        u = mant.astype(jnp.float32) * (1.0 / (1 << 23)) + (0.5 / (1 << 23))  # in (0, 1)
        gumbel = -jnp.log(-jnp.log(u))
    else:
        gumbel = noise_ref[...].astype(jnp.float32)

    # ---- Categorical sample via Gumbel-max (shift invariant) ----
    pert = logits + gumbel
    pmax = jnp.max(pert, axis=0, keepdims=True)
    action = jnp.min(jnp.where(pert == pmax, row, a_pad), axis=0)          # first-max tie break

    # ---- log_prob(action) without materializing a full log_softmax ----
    m = jnp.max(logits, axis=0)
    sumexp = jnp.sum(jnp.exp(logits - m[None, :]), axis=0)                 # padded rows -> 0
    logit_a = jnp.sum(jnp.where(row == action[None, :], logits, 0.0), axis=0)
    logp = logit_a - m - jnp.log(sumexp)

    # lane-dense (1, TB) stores: batch already lives on the lane axis
    a_ref[...] = action[None, :]
    logp_ref[...] = logp[None, :]


def _select_tiling(B, tile_b_max):
    tile_b_max = max(128, _round_up(tile_b_max, 128))
    if B > tile_b_max:
        n_tiles = pl.cdiv(B, tile_b_max)
    elif B >= 2048:
        n_tiles = 2            # keep >= 2 tiles so v7x's two TensorCores both get work
    else:
        n_tiles = 1
    if n_tiles == 1:
        tile = max(8, _round_up(B, 8))
    else:
        tile = _round_up(pl.cdiv(B, n_tiles), 128)   # lane-aligned (1, tile) output blocks
    return tile, n_tiles


def discrete_stochastic_actor(obs, kernel_params, action_dim, rng_key, *,
                              tile_b=4096, use_prng=None):
    """Stochastic forward path. Returns (action int32 (B,), log_prob f32 (B,))."""
    w1, b1, w2, b2, w3, b3 = kernel_params
    B, obs_dim = obs.shape
    h1p = w1.shape[1]
    h2p = w2.shape[0]
    a_pad = w3.shape[0]

    tile, n_tiles = _select_tiling(B, tile_b)
    b_pad = tile * n_tiles
    # minimal batch padding (only when B is not tile-aligned); no transpose/cast pass
    obs_in = obs if b_pad == B else jnp.pad(obs, ((0, b_pad - B), (0, 0)))

    if use_prng is None:
        use_prng = jax.devices()[0].platform == "tpu"

    seed_key, noise_key = jax.random.split(rng_key)
    seed = jax.random.randint(seed_key, (1,), 0, jnp.iinfo(jnp.int32).max, jnp.int32)

    const = lambda i, *_: (0, 0)        # weights/biases: same block -> VMEM-resident
    col_tile = lambda i, *_: (0, i)
    weight_specs = [
        pl.BlockSpec((obs_dim, h1p), const),   # W1  (natural in x out, bf16)
        pl.BlockSpec((1, h1p), const),         # b1
        pl.BlockSpec((h2p, h1p), const),       # W2^T
        pl.BlockSpec((h2p, 1), const),         # b2
        pl.BlockSpec((a_pad, h2p), const),     # W3^T
        pl.BlockSpec((a_pad, 1), const),       # b3
    ]
    out_specs = (pl.BlockSpec((1, tile), col_tile),
                 pl.BlockSpec((1, tile), col_tile))
    out_shape = (jax.ShapeDtypeStruct((1, b_pad), jnp.int32),
                 jax.ShapeDtypeStruct((1, b_pad), jnp.float32))

    flops = 2 * b_pad * (obs_dim * h1p + h1p * h2p + h2p * a_pad)
    transcendentals = b_pad * (4 * a_pad + 1)

    def run(prng):
        in_specs = [pl.BlockSpec((tile, obs_dim), lambda i, *_: (i, 0))]
        args = [obs_in]
        if not prng:
            # host-noise fallback (interpret / non-TPU backends); bf16 halves its DMA
            noise = jax.random.gumbel(noise_key, (a_pad, b_pad), jnp.bfloat16)
            in_specs.append(pl.BlockSpec((a_pad, tile), col_tile))
            args.append(noise)
        in_specs += weight_specs
        args += [w1, b1, w2, b2, w3, b3]
        bytes_accessed = int(sum(a.size * a.dtype.itemsize for a in args) + b_pad * 8)

        a2d, logp2d = pl.pallas_call(
            functools.partial(_actor_kernel, action_dim=action_dim, use_prng=prng),
            grid_spec=pltpu.PrefetchScalarGridSpec(
                num_scalar_prefetch=1,
                grid=(n_tiles,),
                in_specs=in_specs,
                out_specs=out_specs,
            ),
            out_shape=out_shape,
            compiler_params=pltpu.CompilerParams(
                dimension_semantics=("parallel",),      # shard batch tiles across TCs
                vmem_limit_bytes=48 * 1024 * 1024,      # above v5e's 16 MiB scoped default
            ),
            cost_estimate=pl.CostEstimate(flops=flops,
                                          transcendentals=transcendentals,
                                          bytes_accessed=bytes_accessed),
        )(seed, *args)
        return a2d[0, :B], logp2d[0, :B]

    if use_prng:
        try:
            out = run(True)
            jax.block_until_ready(out)
            return out
        except Exception:
            # pltpu.prng_* has no interpret-mode lowering on some versions; fall back.
            pass
    return run(False)


def init_params(key, observation_dim, action_dim, hidden_dims=(32, 32)):
    """Synthetic MLP parameters stored (in_features, out_features), Kaiming-like scale."""
    dims = [observation_dim, *hidden_dims, action_dim]
    params = []
    for i in range(len(dims) - 1):
        key, wk, bk = jax.random.split(key, 3)
        w = jax.random.normal(wk, (dims[i], dims[i + 1]), jnp.float32) / jnp.sqrt(dims[i])
        b = jax.random.normal(bk, (dims[i + 1],), jnp.float32) * 0.01
        params.extend([w, b])
    return tuple(params)


def prepare_params(params, *, hidden_pad=128, action_pad=8):
    """Pad & lay out the 3-layer MLP for the kernel.

    Layer 1 stays (in, out) bf16 (kernel runs it batch-major off the natural obs tile);
    layers 2/3 are stored transposed (out, in) bf16 (kernel runs them feature-major with
    batch on lanes). Hidden widths pad to x128, actions to x8; padded action rows are
    masked inside the kernel. Biases stay f32.
    """
    w1, b1, w2, b2, w3, b3 = params
    d0, h1 = w1.shape
    h2 = w2.shape[1]
    ad = w3.shape[1]
    h1p, h2p, a_pad = _round_up(h1, hidden_pad), _round_up(h2, hidden_pad), _round_up(ad, action_pad)

    w1p = jnp.zeros((d0, h1p), jnp.float32).at[:, :h1].set(w1).astype(jnp.bfloat16)
    b1p = jnp.zeros((1, h1p), jnp.float32).at[0, :h1].set(b1)
    w2p = jnp.zeros((h2p, h1p), jnp.float32).at[:h2, :h1].set(w2.T).astype(jnp.bfloat16)
    b2p = jnp.zeros((h2p, 1), jnp.float32).at[:h2, 0].set(b2)
    w3p = jnp.zeros((a_pad, h2p), jnp.float32).at[:ad, :h2].set(w3.T).astype(jnp.bfloat16)
    b3p = jnp.zeros((a_pad, 1), jnp.float32).at[:ad, 0].set(b3)
    return w1p, b1p, w2p, b2p, w3p, b3p


def _reference_logits(obs, kparams, action_dim):
    """Pure-JAX replica of the kernel's MLP (same bf16 operands, f32 accumulation)."""
    w1, b1, w2, b2, w3, b3 = kparams
    x = obs.astype(jnp.bfloat16)
    h1 = jnp.maximum(jnp.dot(x, w1, preferred_element_type=jnp.float32) + b1, 0.0)
    h2 = jnp.maximum(jnp.dot(h1.astype(jnp.bfloat16), w2.T,
                             preferred_element_type=jnp.float32) + b2[:, 0][None, :], 0.0)
    logits = (jnp.dot(h2.astype(jnp.bfloat16), w3.T, preferred_element_type=jnp.float32)
              + b3[:, 0][None, :])
    return logits[:, :action_dim]


if __name__ == "__main__":
    # Small shapes consistent with the module: batch=8, obs_dim=16, hidden=[32, 32], actions=8.
    B, OBS_DIM, ACTION_DIM = 8, 16, 8
    HIDDEN = (32, 32)

    key = jax.random.PRNGKey(0)
    key, obs_key, sample_key = jax.random.split(key, 3)
    obs = jax.random.normal(obs_key, (B, OBS_DIM), jnp.float32)
    params = prepare_params(init_params(key, OBS_DIM, ACTION_DIM, HIDDEN))

    # TODO(synk): deterministic=True branch (pure argmax of logits, log_prob=None) not
    # exposed; the stochastic default path is what the kernel implements.
    action, log_prob = discrete_stochastic_actor(obs, params, ACTION_DIM, sample_key)
    jax.block_until_ready((action, log_prob))

    # sanity: shapes, actions in range, log-probs valid (<= 0 up to rounding)
    assert action.shape == (B,) and log_prob.shape == (B,)
    assert bool(jnp.all((action >= 0) & (action < ACTION_DIM)))
    assert bool(jnp.all(log_prob <= 1e-5))
    # cross-check log_prob against a pure-JAX log_softmax of the same (padded, bf16) MLP
    ref_lp = jax.nn.log_softmax(_reference_logits(obs, params, ACTION_DIM), axis=-1)
    ref_lp = ref_lp[jnp.arange(B), action]
    assert bool(jnp.all(jnp.abs(ref_lp - log_prob) < 1e-2))
    print("KERNEL_OK")
</pallas_src>

<mosaic_0001>
module attributes {stable_mosaic.version = 11 : i64} {
  func.func @_actor_kernel(%arg0: i32, %arg1: memref<1xi32, #tpu.memory_space<smem>>, %arg2: memref<8x16xf32, #tpu.memory_space<vmem>>, %arg3: memref<8x8xbf16, #tpu.memory_space<vmem>>, %arg4: memref<16x128xbf16, #tpu.memory_space<vmem>>, %arg5: memref<1x128xf32, #tpu.memory_space<vmem>>, %arg6: memref<128x128xbf16, #tpu.memory_space<vmem>>, %arg7: memref<128x1xf32, #tpu.memory_space<vmem>>, %arg8: memref<8x128xbf16, #tpu.memory_space<vmem>>, %arg9: memref<8x1xf32, #tpu.memory_space<vmem>>, %arg10: memref<1x8xi32, #tpu.memory_space<vmem>>, %arg11: memref<1x8xf32, #tpu.memory_space<vmem>>) attributes {dimension_semantics = [#tpu.dimension_semantics<parallel>], iteration_bounds = array<i64: 1>, scalar_prefetch = 1 : i64, scratch_operands = 0 : i64, tpu.core_type = #tpu.core_type<tc>, window_params = [{transform_indices = @transform_0, window_bounds = array<i64: 8, 16>}, {transform_indices = @transform_1, window_bounds = array<i64: 8, 8>}, {pipeline_mode = #tpu.pipeline_mode<synchronous>, transform_indices = @transform_2, window_bounds = array<i64: 16, 128>}, {pipeline_mode = #tpu.pipeline_mode<synchronous>, transform_indices = @transform_3, window_bounds = array<i64: 1, 128>}, {pipeline_mode = #tpu.pipeline_mode<synchronous>, transform_indices = @transform_4, window_bounds = array<i64: 128, 128>}, {pipeline_mode = #tpu.pipeline_mode<synchronous>, transform_indices = @transform_5, window_bounds = array<i64: 128, 1>}, {pipeline_mode = #tpu.pipeline_mode<synchronous>, transform_indices = @transform_6, window_bounds = array<i64: 8, 128>}, {pipeline_mode = #tpu.pipeline_mode<synchronous>, transform_indices = @transform_7, window_bounds = array<i64: 8, 1>}, {transform_indices = @transform_8, window_bounds = array<i64: 1, 8>}, {transform_indices = @transform_9, window_bounds = array<i64: 1, 8>}]} {
    %c0 = arith.constant 0 : index
    %c0_0 = arith.constant 0 : index
    %0 = vector.load %arg2[%c0, %c0_0] : memref<8x16xf32, #tpu.memory_space<vmem>>, vector<8x16xf32>
    %1 = arith.truncf %0 : vector<8x16xf32> to vector<8x16xbf16>
    %c0_1 = arith.constant 0 : index
    %c0_2 = arith.constant 0 : index
    %2 = vector.load %arg4[%c0_1, %c0_2] : memref<16x128xbf16, #tpu.memory_space<vmem>>, vector<16x128xbf16>
    %cst = arith.constant dense<0.000000e+00> : vector<8x128xf32>
    %3 = tpu.matmul %1, %2, %cst {dimension_numbers = #tpu.dot_dimension_numbers<[1], [0], [0], [1], [0, 0, 1, 1], [], []>} : vector<8x16xbf16>, vector<16x128xbf16>, vector<8x128xf32> -> vector<8x128xf32>
    %c0_3 = arith.constant 0 : index
    %c0_4 = arith.constant 0 : index
    %4 = vector.load %arg5[%c0_3, %c0_4] : memref<1x128xf32, #tpu.memory_space<vmem>>, vector<1x128xf32>
    %5 = vector.broadcast %4 : vector<1x128xf32> to vector<8x128xf32>
    %6 = arith.addf %3, %5 : vector<8x128xf32>
    %cst_5 = arith.constant 0.000000e+00 : f32
    %7 = vector.broadcast %cst_5 : f32 to vector<8x128xf32>
    %8 = arith.maximumf %6, %7 : vector<8x128xf32>
    %9 = tpu.transpose %8, [1, 0] : vector<8x128xf32> -> vector<128x8xf32>
    %10 = arith.truncf %9 : vector<128x8xf32> to vector<128x8xbf16>
    %c0_6 = arith.constant 0 : index
    %c0_7 = arith.constant 0 : index
    %11 = vector.load %arg6[%c0_6, %c0_7] : memref<128x128xbf16, #tpu.memory_space<vmem>>, vector<128x128xbf16>
    %cst_8 = arith.constant dense<0.000000e+00> : vector<128x8xf32>
    %12 = tpu.matmul %11, %10, %cst_8 {dimension_numbers = #tpu.dot_dimension_numbers<[1], [0], [0], [1], [0, 0, 1, 1], [], []>} : vector<128x128xbf16>, vector<128x8xbf16>, vector<128x8xf32> -> vector<128x8xf32>
    %c0_9 = arith.constant 0 : index
    %c0_10 = arith.constant 0 : index
    %13 = vector.load %arg7[%c0_9, %c0_10] : memref<128x1xf32, #tpu.memory_space<vmem>>, vector<128x1xf32>
    %14 = vector.broadcast %13 : vector<128x1xf32> to vector<128x8xf32>
    %15 = arith.addf %12, %14 : vector<128x8xf32>
    %cst_11 = arith.constant 0.000000e+00 : f32
    %16 = vector.broadcast %cst_11 : f32 to vector<128x8xf32>
    %17 = arith.maximumf %15, %16 : vector<128x8xf32>
    %c0_12 = arith.constant 0 : index
    %c0_13 = arith.constant 0 : index
    %18 = vector.load %arg8[%c0_12, %c0_13] : memref<8x128xbf16, #tpu.memory_space<vmem>>, vector<8x128xbf16>
    %19 = arith.truncf %17 : vector<128x8xf32> to vector<128x8xbf16>
    %cst_14 = arith.constant dense<0.000000e+00> : vector<8x8xf32>
    %20 = tpu.matmul %18, %19, %cst_14 {dimension_numbers = #tpu.dot_dimension_numbers<[1], [0], [0], [1], [0, 0, 1, 1], [], []>} : vector<8x128xbf16>, vector<128x8xbf16>, vector<8x8xf32> -> vector<8x8xf32>
    %c0_15 = arith.constant 0 : index
    %c0_16 = arith.constant 0 : index
    %21 = vector.load %arg9[%c0_15, %c0_16] : memref<8x1xf32, #tpu.memory_space<vmem>>, vector<8x1xf32>
    %22 = vector.broadcast %21 : vector<8x1xf32> to vector<8x8xf32>
    %23 = arith.addf %20, %22 : vector<8x8xf32>
    %24 = tpu.iota {dimensions = array<i32: 0>} : vector<8x8xi32>
    %c8_i32 = arith.constant 8 : i32
    %25 = vector.broadcast %c8_i32 : i32 to vector<8x8xi32>
    %26 = arith.cmpi slt, %24, %25 : vector<8x8xi32>
    %cst_17 = arith.constant -1.000000e+30 : f32
    %27 = vector.broadcast %cst_17 : f32 to vector<8x8xf32>
    %28 = arith.select %26, %23, %27 : vector<8x8xi1>, vector<8x8xf32>
    %c0_18 = arith.constant 0 : index
    %c0_19 = arith.constant 0 : index
    %29 = vector.load %arg3[%c0_18, %c0_19] : memref<8x8xbf16, #tpu.memory_space<vmem>>, vector<8x8xbf16>
    %30 = arith.extf %29 : vector<8x8xbf16> to vector<8x8xf32>
    %31 = arith.addf %28, %30 : vector<8x8xf32>
    %cst_20 = arith.constant dense<0xFF800000> : vector<8xf32>
    %32 = vector.multi_reduction <maximumf>, %31, %cst_20 [0] : vector<8x8xf32> to vector<8xf32>
    %33 = vector.shape_cast %32 : vector<8xf32> to vector<1x8xf32>
    %34 = vector.broadcast %33 : vector<1x8xf32> to vector<8x8xf32>
    %35 = arith.cmpf oeq, %31, %34 : vector<8x8xf32>
    %c8_i32_21 = arith.constant 8 : i32
    %36 = vector.broadcast %c8_i32_21 : i32 to vector<8x8xi32>
    %37 = arith.select %35, %24, %36 : vector<8x8xi1>, vector<8x8xi32>
    %cst_22 = arith.constant dense<2147483647> : vector<8xi32>
    %38 = vector.multi_reduction <minsi>, %37, %cst_22 [0] : vector<8x8xi32> to vector<8xi32>
    %cst_23 = arith.constant dense<0xFF800000> : vector<8xf32>
    %39 = vector.multi_reduction <maximumf>, %28, %cst_23 [0] : vector<8x8xf32> to vector<8xf32>
    %40 = vector.shape_cast %39 : vector<8xf32> to vector<1x8xf32>
    %41 = vector.broadcast %40 : vector<1x8xf32> to vector<8x8xf32>
    %42 = arith.subf %28, %41 : vector<8x8xf32>
    %43 = math.exp %42 : vector<8x8xf32>
    %cst_24 = arith.constant dense<0.000000e+00> : vector<8xf32>
    %44 = vector.multi_reduction <add>, %43, %cst_24 [0] : vector<8x8xf32> to vector<8xf32>
    %45 = vector.shape_cast %38 : vector<8xi32> to vector<1x8xi32>
    %46 = vector.broadcast %45 : vector<1x8xi32> to vector<8x8xi32>
    %47 = arith.cmpi eq, %24, %46 : vector<8x8xi32>
    %cst_25 = arith.constant 0.000000e+00 : f32
    %48 = vector.broadcast %cst_25 : f32 to vector<8x8xf32>
    %49 = arith.select %47, %28, %48 : vector<8x8xi1>, vector<8x8xf32>
    %cst_26 = arith.constant dense<0.000000e+00> : vector<8xf32>
    %50 = vector.multi_reduction <add>, %49, %cst_26 [0] : vector<8x8xf32> to vector<8xf32>
    %51 = arith.subf %50, %39 : vector<8xf32>
    %52 = math.log %44 : vector<8xf32>
    %53 = arith.subf %51, %52 : vector<8xf32>
    %54 = vector.shape_cast %38 : vector<8xi32> to vector<1x8xi32>
    %c0_27 = arith.constant 0 : index
    %c0_28 = arith.constant 0 : index
    %55 = vector.load %arg10[%c0_27, %c0_28] : memref<1x8xi32, #tpu.memory_space<vmem>>, vector<1x8xi32>
    tpu.vector_store %arg10[%c0_27, %c0_28], %54 {strides = array<i32>} : memref<1x8xi32, #tpu.memory_space<vmem>>, vector<1x8xi32>,
    %56 = vector.shape_cast %53 : vector<8xf32> to vector<1x8xf32>
    %c0_29 = arith.constant 0 : index
    %c0_30 = arith.constant 0 : index
    %57 = vector.load %arg11[%c0_29, %c0_30] : memref<1x8xf32, #tpu.memory_space<vmem>>, vector<1x8xf32>
    tpu.vector_store %arg11[%c0_29, %c0_30], %56 {strides = array<i32>} : memref<1x8xf32, #tpu.memory_space<vmem>>, vector<1x8xf32>,
    return
  }
  func.func @transform_0(%arg0: i32, %arg1: memref<1xi32, #tpu.memory_space<smem>>) -> (i32, i32) {
    %c0_i32 = arith.constant 0 : i32
    %c0_i32_0 = arith.constant 0 : i32
    return %arg0, %c0_i32 : i32, i32
  }
  func.func @transform_1(%arg0: i32, %arg1: memref<1xi32, #tpu.memory_space<smem>>) -> (i32, i32) {
    %c0_i32 = arith.constant 0 : i32
    %c0_i32_0 = arith.constant 0 : i32
    return %c0_i32, %arg0 : i32, i32
  }
  func.func @transform_2(%arg0: i32, %arg1: memref<1xi32, #tpu.memory_space<smem>>) -> (i32, i32) {
    %c0_i32 = arith.constant 0 : i32
    %c0_i32_0 = arith.constant 0 : i32
    %c0_i32_1 = arith.constant 0 : i32
    return %c0_i32, %c0_i32_0 : i32, i32
  }
  func.func @transform_3(%arg0: i32, %arg1: memref<1xi32, #tpu.memory_space<smem>>) -> (i32, i32) {
    %c0_i32 = arith.constant 0 : i32
    %c0_i32_0 = arith.constant 0 : i32
    %c0_i32_1 = arith.constant 0 : i32
    return %c0_i32, %c0_i32_0 : i32, i32
  }
  func.func @transform_4(%arg0: i32, %arg1: memref<1xi32, #tpu.memory_space<smem>>) -> (i32, i32) {
    %c0_i32 = arith.constant 0 : i32
    %c0_i32_0 = arith.constant 0 : i32
    %c0_i32_1 = arith.constant 0 : i32
    return %c0_i32, %c0_i32_0 : i32, i32
  }
  func.func @transform_5(%arg0: i32, %arg1: memref<1xi32, #tpu.memory_space<smem>>) -> (i32, i32) {
    %c0_i32 = arith.constant 0 : i32
    %c0_i32_0 = arith.constant 0 : i32
    %c0_i32_1 = arith.constant 0 : i32
    return %c0_i32, %c0_i32_0 : i32, i32
  }
  func.func @transform_6(%arg0: i32, %arg1: memref<1xi32, #tpu.memory_space<smem>>) -> (i32, i32) {
    %c0_i32 = arith.constant 0 : i32
    %c0_i32_0 = arith.constant 0 : i32
    %c0_i32_1 = arith.constant 0 : i32
    return %c0_i32, %c0_i32_0 : i32, i32
  }
  func.func @transform_7(%arg0: i32, %arg1: memref<1xi32, #tpu.memory_space<smem>>) -> (i32, i32) {
    %c0_i32 = arith.constant 0 : i32
    %c0_i32_0 = arith.constant 0 : i32
    %c0_i32_1 = arith.constant 0 : i32
    return %c0_i32, %c0_i32_0 : i32, i32
  }
  func.func @transform_8(%arg0: i32, %arg1: memref<1xi32, #tpu.memory_space<smem>>) -> (i32, i32) {
    %c0_i32 = arith.constant 0 : i32
    %c0_i32_0 = arith.constant 0 : i32
    return %c0_i32, %arg0 : i32, i32
  }
  func.func @transform_9(%arg0: i32, %arg1: memref<1xi32, #tpu.memory_space<smem>>) -> (i32, i32) {
    %c0_i32 = arith.constant 0 : i32
    %c0_i32_0 = arith.constant 0 : i32
    return %c0_i32, %arg0 : i32, i32
  }
}

</mosaic_0001>

<llo_original>
// kernel: tpu_custom_call.1
$region0: #{tpu_custom_call.1}
  #allocation0 [shape = 'u32[]', space=smem, size = 0x4, offset = 0x4, fixed_abs, tag = 'smem constant byte address 0x4 - core index']
  #allocation1 [shape = 'u32[144,128]{1,0:T(1,128)}', space=vmem, size = 0x12000, scoped, tag = 'internal scratch']
  #allocation2 [shape = 's32[1]{0}', space=sflag, size = 0x4, scoped, tag = 'scoped memory for tpu_custom_call.1']
  #allocation3 [shape = 's32[1]{0:T(128)S(6)}', space=smem, size = 0x200, scoped, tag = 'prefetched SMEM operand 0']
  %s0 = inlined_call_operand.<no memory space> [shape: s32[1], index: 0, kind: input, shape index: {}]
  %s1 = inlined_call_operand.vmem [shape: f32[8,16], index: 1, kind: input, shape index: {}]
  %s2 = inlined_call_operand.vmem [shape: bf16[8,8], index: 2, kind: input, shape index: {}]
  %s3 = inlined_call_operand.vmem [shape: bf16[16,128], index: 3, kind: input, shape index: {}]
  %s4 = inlined_call_operand.vmem [shape: f32[1,128], index: 4, kind: input, shape index: {}]
  %s5 = inlined_call_operand.vmem [shape: bf16[128,128], index: 5, kind: input, shape index: {}]
  %s6 = inlined_call_operand.vmem [shape: f32[128,1], index: 6, kind: input, shape index: {}]
  %s7 = inlined_call_operand.vmem [shape: bf16[8,128], index: 7, kind: input, shape index: {}]
  %s8 = inlined_call_operand.vmem [shape: f32[8,1], index: 8, kind: input, shape index: {}]
  %s9 = inlined_call_operand.hbm [shape: s32[1,8], index: 9, kind: output, shape index: {0}]
  %s10 = inlined_call_operand.hbm [shape: f32[1,8], index: 10, kind: output, shape index: {1}]
  %11 = xla_tuple %s9, %s10
  %s12 = sld [smem:[#allocation0]]
  $region50: #{tpu_custom_call.1} parent=0
    _
  %s14 = ssub.s32 1, %s12
  %s15 = scalar_select 0, %s14, %s12
  %16 = sst [smem:[#allocation3]] %s0
  $region1: #{tpu_custom_call.1} parent=0
    #allocation4 [shape = 'u8[512]{0}', space=vmem, size = 0x400, scoped, tag = 'output window, operand 0, single buffered']
    #allocation5 [shape = 's32[1]{0}', space=sflag, size = 0x4, scoped, tag = 'scoped memory for tpu_custom_call.1']
    #allocation6 [shape = 'u8[512]{0}', space=vmem, size = 0x400, scoped, tag = 'output window, operand 1, single buffered']
    #allocation7 [shape = 's32[1]{0}', space=sflag, size = 0x4, scoped, tag = 'scoped memory for tpu_custom_call.1']
    %17 = vsyncpa [#allocation5], 0
    %18 = vsyncpa [#allocation7], 0
    // Predicated region
    $region2: #{tpu_custom_call.1} parent=1 // pred_check
      _
    $region3: #{tpu_custom_call.1} parent=1 // pred_check_branch
      %20 = sbr.rel (0) target = $region5
    $region4: #{tpu_custom_call.1} parent=1 // pred_region
      _
    $region5: #{tpu_custom_call.1} parent=1 // pred_fallthru
      _
    // Predicated region
    $region6: #{tpu_custom_call.1} parent=1 // pred_check
      _
    $region7: #{tpu_custom_call.1} parent=1 // pred_check_branch
      %22 = sbr.rel (0) target = $region9
    $region8: #{tpu_custom_call.1} parent=1 // pred_region
      _
    $region9: #{tpu_custom_call.1} parent=1 // pred_fallthru
      _
    // Predicated region
    $region10: #{tpu_custom_call.1} parent=1 // pred_check
      _
    $region11: #{tpu_custom_call.1} parent=1 // pred_check_branch
      %24 = sbr.rel (0) target = $region13
    $region12: #{tpu_custom_call.1} parent=1 // pred_region
      _
    $region13: #{tpu_custom_call.1} parent=1 // pred_fallthru
      _
    // Predicated region
    $region14: #{tpu_custom_call.1} parent=1 // pred_check
      _
    $region15: #{tpu_custom_call.1} parent=1 // pred_check_branch
      %26 = sbr.rel (0) target = $region17
    $region16: #{tpu_custom_call.1} parent=1 // pred_region
      _
    $region17: #{tpu_custom_call.1} parent=1 // pred_fallthru
      _
    // Predicated region
    $region18: #{tpu_custom_call.1} parent=1 // pred_check
      _
    $region19: #{tpu_custom_call.1} parent=1 // pred_check_branch
      %28 = sbr.rel (0) target = $region21
    $region20: #{tpu_custom_call.1} parent=1 // pred_region
      _
    $region21: #{tpu_custom_call.1} parent=1 // pred_fallthru
      _
    // Predicated region
    $region22: #{tpu_custom_call.1} parent=1 // pred_check
      _
    $region23: #{tpu_custom_call.1} parent=1 // pred_check_branch
      %30 = sbr.rel (0) target = $region25
    $region24: #{tpu_custom_call.1} parent=1 // pred_region
      _
    $region25: #{tpu_custom_call.1} parent=1 // pred_fallthru
      _
    // Predicated region
    $region26: #{tpu_custom_call.1} parent=1 // pred_check
      _
    $region27: #{tpu_custom_call.1} parent=1 // pred_check_branch
      %32 = sbr.rel (0) target = $region29
    $region28: #{tpu_custom_call.1} parent=1 // pred_region
      _
    $region29: #{tpu_custom_call.1} parent=1 // pred_fallthru
      _
    // Predicated region
    $region30: #{tpu_custom_call.1} parent=1 // pred_check
      _
    $region31: #{tpu_custom_call.1} parent=1 // pred_check_branch
      %34 = sbr.rel (0) target = $region33
    $region32: #{tpu_custom_call.1} parent=1 // pred_region
      _
    $region33: #{tpu_custom_call.1} parent=1 // pred_fallthru
      _
    %v36 = vld [vmem:[%s1] sm:$0xff]
    %v37 = vpack.c.bf16 %v36, %v36
    %v38 = vld [vmem:[%s3] sm:$0xf]
    %v39 = vld [vmem:[%s3 + $0x4] sm:$0xf]
    %v40 = vld [vmem:[%s4] sm:$0x1]
    %v42 = vlaneseq
    %v43 = vshrl.u32 %v42, 7
    %v44 = vsub.s32 0, %v43
    %v45 = vrot.slane %v40, %v44
    %v49 = vunpack.c.l.b16 %v38
    %v50 = vunpack.c.l.b16 %v39
    %v51 = vpack.c.b16 %v50, %v49
    %vm53 = vcmask 130048
    %v55 = vsel %vm53, %v37, 0
    %57 = vmatprep.subr.bf16.mxu0 0
    %58 = vmatpush1.bf16.msra.mxu0 %v51
    %59 = vmatprep.subr.bf16.mxu0 0
    %60 = vmatpush1.bf16.msra.mxu0 0
    %61 = vmatprep.subr.bf16.mxu0 0
    %62 = vmatpush1.bf16.msra.mxu0 0
    %63 = vmatprep.subr.bf16.mxu0 0
    %64 = vmatpush1.bf16.msra.mxu0 0
    %65 = vmatprep.subr.bf16.mxu0 0
    %66 = vmatpush1.bf16.msra.mxu0 0
    %67 = vmatprep.subr.bf16.mxu0 0
    %68 = vmatpush1.bf16.msra.mxu0 0
    %69 = vmatprep.subr.bf16.mxu0 0
    %70 = vmatpush1.bf16.msra.mxu0 0
    %71 = vmatprep.subr.bf16.mxu0 0
    %72 = vmatpush1.bf16.msra.mxu0 0
    %73 = vmatprep.subr.bf16.mxu0 0
    %74 = vmatpush1.bf16.msra.mxu0 0
    %75 = vmatprep.subr.bf16.mxu0 0
    %76 = vmatpush1.bf16.msra.mxu0 0
    %77 = vmatprep.subr.bf16.mxu0 0
    %78 = vmatpush1.bf16.msra.mxu0 0
    %79 = vmatprep.subr.bf16.mxu0 0
    %80 = vmatpush1.bf16.msra.mxu0 0
    %81 = vmatprep.subr.bf16.mxu0 0
    %82 = vmatpush1.bf16.msra.mxu0 0
    %83 = vmatprep.subr.bf16.mxu0 0
    %84 = vmatpush1.bf16.msra.mxu0 0
    %85 = vmatprep.subr.bf16.mxu0 0
    %86 = vmatpush1.bf16.msra.mxu0 0
    %87 = vmatprep.subr.bf16.mxu0 0
    %88 = vmatpush1.bf16.msra.mxu0 0
    %89 = vmatprep.mubr.bf16.mxu0 0
    %90 = vmatmul.mubr.bf16.gmra.mrb[0].mxu0 %v55
    %v91 = vpop.f32.mrb[0].mxu0
    %v92 = vadd.f32 %v45, %v91
    %v93 = vpop.f32.mrb[0].mxu0
    %v94 = vpop.f32.mrb[0].mxu0
    %v95 = vpop.f32.mrb[0].mxu0
    %96 = vdwg.mxu0
    %v97 = vmax.f32 %v92, 0.0
    %98 = vxpose.xlu0.b32.start [1/16] %v97, 128
    %99 = vxpose.xlu0.b32.cont [2/16] 0.0, 128
    %100 = vxpose.xlu0.b32.cont [3/16] 0.0, 128
    %101 = vxpose.xlu0.b32.cont [4/16] 0.0, 128
    %102 = vxpose.xlu0.b32.cont [5/16] 0.0, 128
    %103 = vxpose.xlu0.b32.cont [6/16] 0.0, 128
    %104 = vxpose.xlu0.b32.cont [7/16] 0.0, 128
    %105 = vxpose.xlu0.b32.cont [8/16] 0.0, 128
    %106 = vxpose.xlu0.b32.cont [9/16] 0.0, 128
    %107 = vxpose.xlu0.b32.cont [10/16] 0.0, 128
    %108 = vxpose.xlu0.b32.cont [11/16] 0.0, 128
    %109 = vxpose.xlu0.b32.cont [12/16] 0.0, 128
    %110 = vxpose.xlu0.b32.cont [13/16] 0.0, 128
    %111 = vxpose.xlu0.b32.cont [14/16] 0.0, 128
    %112 = vxpose.xlu0.b32.cont [15/16] 0.0, 128
    %113 = vxpose.xlu0.b32.end [16/16] 0.0, 128
    %v114 = vpop.trf.xlu0
    %v115 = vpop.trf.xlu0
    %v116 = vpop.trf.xlu0
    %v117 = vpop.trf.xlu0
    %v118 = vpop.trf.xlu0
    %v119 = vpop.trf.xlu0
    %v120 = vpop.trf.xlu0
    %v121 = vpop.trf.xlu0
    %v122 = vpop.trf.xlu0
    %v123 = vpop.trf.xlu0
    %v124 = vpop.trf.xlu0
    %v125 = vpop.trf.xlu0
    %v126 = vpop.trf.xlu0
    %v127 = vpop.trf.xlu0
    %v128 = vpop.trf.xlu0
    %v129 = vpop.trf.xlu0
    %v130 = vpack.c.bf16 %v115, %v114
    %v131 = vpack.c.bf16 %v117, %v116
    %v132 = vpack.c.bf16 %v119, %v118
    %v133 = vpack.c.bf16 %v121, %v120
    %v134 = vpack.c.bf16 %v123, %v122
    %v135 = vpack.c.bf16 %v125, %v124
    %v136 = vpack.c.bf16 %v127, %v126
    %v137 = vpack.c.bf16 %v129, %v128
    %v138 = vld [vmem:[%s5] sm:$0xf]
    %v139 = vld [vmem:[%s5 + $0x4] sm:$0xf]
    %v140 = vld [vmem:[%s5 + $0x8] sm:$0xf]
    %v141 = vld [vmem:[%s5 + $0xc] sm:$0xf]
    %v142 = vld [vmem:[%s5 + $0x10] sm:$0xf]
    %v143 = vld [vmem:[%s5 + $0x14] sm:$0xf]
    %v144 = vld [vmem:[%s5 + $0x18] sm:$0xf]
    %v145 = vld [vmem:[%s5 + $0x1c] sm:$0xf]
    %v146 = vld [vmem:[%s5 + $0x20] sm:$0xf]
    %v147 = vld [vmem:[%s5 + $0x24] sm:$0xf]
    %v148 = vld [vmem:[%s5 + $0x28] sm:$0xf]
    %v149 = vld [vmem:[%s5 + $0x2c] sm:$0xf]
    %v150 = vld [vmem:[%s5 + $0x30] sm:$0xf]
    %v151 = vld [vmem:[%s5 + $0x34] sm:$0xf]
    %v152 = vld [vmem:[%s5 + $0x38] sm:$0xf]
    %v153 = vld [vmem:[%s5 + $0x3c] sm:$0xf]
    %v154 = vld [vmem:[%s6] sm:$0xff]
    %v155 = vld [vmem:[%s6 + $0x8] sm:$0xff]
    %v156 = vld [vmem:[%s6 + $0x10] sm:$0xff]
    %v157 = vld [vmem:[%s6 + $0x18] sm:$0xff]
    %v158 = vld [vmem:[%s6 + $0x20] sm:$0xff]
    %v159 = vld [vmem:[%s6 + $0x28] sm:$0xff]
    %v160 = vld [vmem:[%s6 + $0x30] sm:$0xff]
    %v161 = vld [vmem:[%s6 + $0x38] sm:$0xff]
    %v162 = vld [vmem:[%s6 + $0x40] sm:$0xff]
    %v163 = vld [vmem:[%s6 + $0x48] sm:$0xff]
    %v164 = vld [vmem:[%s6 + $0x50] sm:$0xff]
    %v165 = vld [vmem:[%s6 + $0x58] sm:$0xff]
    %v166 = vld [vmem:[%s6 + $0x60] sm:$0xff]
    %v167 = vld [vmem:[%s6 + $0x68] sm:$0xff]
    %v168 = vld [vmem:[%s6 + $0x70] sm:$0xff]
    %v169 = vld [vmem:[%s6 + $0x78] sm:$0xff]
    %171 = vset.pattern.permute.xlu0 0
    %172 = vperm.xlu0 %171, %v154
    %v173 = vpop.permute.xlu0 %172
    %176 = vset.pattern.permute.xlu0 0
    %177 = vperm.xlu0 %176, %v155
    %v178 = vpop.permute.xlu0 %177
    %181 = vset.pattern.permute.xlu0 0
    %182 = vperm.xlu0 %181, %v156
    %v183 = vpop.permute.xlu0 %182
    %186 = vset.pattern.permute.xlu0 0
    %187 = vperm.xlu0 %186, %v157
    %v188 = vpop.permute.xlu0 %187
    %191 = vset.pattern.permute.xlu0 0
    %192 = vperm.xlu0 %191, %v158
    %v193 = vpop.permute.xlu0 %192
    %196 = vset.pattern.permute.xlu0 0
    %197 = vperm.xlu0 %196, %v159
    %v198 = vpop.permute.xlu0 %197
    %201 = vset.pattern.permute.xlu0 0
    %202 = vperm.xlu0 %201, %v160
    %v203 = vpop.permute.xlu0 %202
    %206 = vset.pattern.permute.xlu0 0
    %207 = vperm.xlu0 %206, %v161
    %v208 = vpop.permute.xlu0 %207
    %211 = vset.pattern.permute.xlu0 0
    %212 = vperm.xlu0 %211, %v162
    %v213 = vpop.permute.xlu0 %212
    %216 = vset.pattern.permute.xlu0 0
    %217 = vperm.xlu0 %216, %v163
    %v218 = vpop.permute.xlu0 %217
    %221 = vset.pattern.permute.xlu0 0
    %222 = vperm.xlu0 %221, %v164
    %v223 = vpop.permute.xlu0 %222
    %226 = vset.pattern.permute.xlu0 0
    %227 = vperm.xlu0 %226, %v165
    %v228 = vpop.permute.xlu0 %227
    %231 = vset.pattern.permute.xlu0 0
    %232 = vperm.xlu0 %231, %v166
    %v233 = vpop.permute.xlu0 %232
    %236 = vset.pattern.permute.xlu0 0
    %237 = vperm.xlu0 %236, %v167
    %v238 = vpop.permute.xlu0 %237
    %241 = vset.pattern.permute.xlu0 0
    %242 = vperm.xlu0 %241, %v168
    %v243 = vpop.permute.xlu0 %242
    %246 = vset.pattern.permute.xlu0 0
    %247 = vperm.xlu0 %246, %v169
    %v248 = vpop.permute.xlu0 %247
    %v266 = vunpack.c.l.b16 %v138
    %v267 = vunpack.c.l.b16 %v139
    %v268 = vunpack.c.l.b16 %v140
    %v269 = vunpack.c.l.b16 %v141
    %v270 = vunpack.c.l.b16 %v142
    %v271 = vunpack.c.l.b16 %v143
    %v272 = vunpack.c.l.b16 %v144
    %v273 = vunpack.c.l.b16 %v145
    %v274 = vunpack.c.l.b16 %v146
    %v275 = vunpack.c.l.b16 %v147
    %v276 = vunpack.c.l.b16 %v148
    %v277 = vunpack.c.l.b16 %v149
    %v278 = vunpack.c.l.b16 %v150
    %v279 = vunpack.c.l.b16 %v151
    %v280 = vunpack.c.l.b16 %v152
    %v281 = vunpack.c.l.b16 %v153
    %v282 = vpack.c.b16 %v267, %v266
    %v283 = vpack.c.b16 %v269, %v268
    %v284 = vpack.c.b16 %v271, %v270
    %v285 = vpack.c.b16 %v273, %v272
    %v286 = vpack.c.b16 %v275, %v274
    %v287 = vpack.c.b16 %v277, %v276
    %v288 = vpack.c.b16 %v279, %v278
    %v289 = vpack.c.b16 %v281, %v280
    %298 = vmatprep.subr.bf16.mxu0 0
    %299 = vmatpush1.bf16.msra.mxu0 %v130
    %300 = vmatprep.subr.bf16.mxu0 0
    %301 = vmatpush1.bf16.msra.mxu0 %v131
    %302 = vmatprep.subr.bf16.mxu0 0
    %303 = vmatpush1.bf16.msra.mxu0 %v132
    %304 = vmatprep.subr.bf16.mxu0 0
    %305 = vmatpush1.bf16.msra.mxu0 %v133
    %306 = vmatprep.subr.bf16.mxu0 0
    %307 = vmatpush1.bf16.msra.mxu0 %v134
    %308 = vmatprep.subr.bf16.mxu0 0
    %309 = vmatpush1.bf16.msra.mxu0 %v135
    %310 = vmatprep.subr.bf16.mxu0 0
    %311 = vmatpush1.bf16.msra.mxu0 %v136
    %312 = vmatprep.subr.bf16.mxu0 0
    %313 = vmatpush1.bf16.msra.mxu0 %v137
    %314 = vmatprep.subr.bf16.mxu0 0
    %315 = vmatpush1.bf16.msra.mxu0 0
    %316 = vmatprep.subr.bf16.mxu0 0
    %317 = vmatpush1.bf16.msra.mxu0 0
    %318 = vmatprep.subr.bf16.mxu0 0
    %319 = vmatpush1.bf16.msra.mxu0 0
    %320 = vmatprep.subr.bf16.mxu0 0
    %321 = vmatpush1.bf16.msra.mxu0 0
    %322 = vmatprep.subr.bf16.mxu0 0
    %323 = vmatpush1.bf16.msra.mxu0 0
    %324 = vmatprep.subr.bf16.mxu0 0
    %325 = vmatpush1.bf16.msra.mxu0 0
    %326 = vmatprep.subr.bf16.mxu0 0
    %327 = vmatpush1.bf16.msra.mxu0 0
    %328 = vmatprep.subr.bf16.mxu0 0
    %329 = vmatpush1.bf16.msra.mxu0 0
    %330 = vmatprep.mubr.bf16.mxu0 0
    %331 = vmatmul.mubr.bf16.gmra.mrb[0].mxu0 %v282
    %v332 = vpop.f32.mrb[0].mxu0
    %v333 = vadd.f32 %v173, %v332
    %v334 = vpop.f32.mrb[0].mxu0
    %v335 = vpop.f32.mrb[0].mxu0
    %v336 = vadd.f32 %v178, %v335
    %v337 = vpop.f32.mrb[0].mxu0
    %338 = vmatprep.mubr.bf16.mxu0 0
    %339 = vmatmul.mubr.bf16.gmra.mrb[0].mxu0 %v283
    %v340 = vpop.f32.mrb[0].mxu0
    %v341 = vadd.f32 %v183, %v340
    %v342 = vpop.f32.mrb[0].mxu0
    %v343 = vpop.f32.mrb[0].mxu0
    %v344 = vadd.f32 %v188, %v343
    %v345 = vpop.f32.mrb[0].mxu0
    %346 = vmatprep.mubr.bf16.mxu0 0
    %347 = vmatmul.mubr.bf16.gmra.mrb[0].mxu0 %v284
    %v348 = vpop.f32.mrb[0].mxu0
    %v349 = vadd.f32 %v193, %v348
    %v350 = vpop.f32.mrb[0].mxu0
    %v351 = vpop.f32.mrb[0].mxu0
    %v352 = vadd.f32 %v198, %v351
    %v353 = vpop.f32.mrb[0].mxu0
    %354 = vmatprep.mubr.bf16.mxu0 0
    %355 = vmatmul.mubr.bf16.gmra.mrb[0].mxu0 %v285
    %v356 = vpop.f32.mrb[0].mxu0
    %v357 = vadd.f32 %v203, %v356
    %v358 = vpop.f32.mrb[0].mxu0
    %v359 = vpop.f32.mrb[0].mxu0
    %v360 = vadd.f32 %v208, %v359
    %v361 = vpop.f32.mrb[0].mxu0
    %362 = vmatprep.mubr.bf16.mxu0 0
    %363 = vmatmul.mubr.bf16.gmra.mrb[0].mxu0 %v286
    %v364 = vpop.f32.mrb[0].mxu0
    %v365 = vadd.f32 %v213, %v364
    %v366 = vpop.f32.mrb[0].mxu0
    %v367 = vpop.f32.mrb[0].mxu0
    %v368 = vadd.f32 %v218, %v367
    %v369 = vpop.f32.mrb[0].mxu0
    %370 = vmatprep.mubr.bf16.mxu0 0
    %371 = vmatmul.mubr.bf16.gmra.mrb[0].mxu0 %v287
    %v372 = vpop.f32.mrb[0].mxu0
    %v373 = vadd.f32 %v223, %v372
    %v374 = vpop.f32.mrb[0].mxu0
    %v375 = vpop.f32.mrb[0].mxu0
    %v376 = vadd.f32 %v228, %v375
    %v377 = vpop.f32.mrb[0].mxu0
    %378 = vmatprep.mubr.bf16.mxu0 0
    %379 = vmatmul.mubr.bf16.gmra.mrb[0].mxu0 %v288
    %v380 = vpop.f32.mrb[0].mxu0
    %v381 = vadd.f32 %v233, %v380
    %v382 = vpop.f32.mrb[0].mxu0
    %v383 = vpop.f32.mrb[0].mxu0
    %v384 = vadd.f32 %v238, %v383
    %v385 = vpop.f32.mrb[0].mxu0
    %386 = vmatprep.mubr.bf16.mxu0 0
    %387 = vmatmul.mubr.bf16.gmra.mrb[0].mxu0 %v289
    %v388 = vpop.f32.mrb[0].mxu0
    %v389 = vadd.f32 %v243, %v388
    %v390 = vpop.f32.mrb[0].mxu0
    %v391 = vpop.f32.mrb[0].mxu0
    %v392 = vadd.f32 %v248, %v391
    %v393 = vpop.f32.mrb[0].mxu0
    %394 = vdwg.mxu0
    %v395 = vmax.f32 %v333, 0.0
    %v396 = vmax.f32 %v336, 0.0
    %v397 = vmax.f32 %v341, 0.0
    %v398 = vmax.f32 %v344, 0.0
    %v399 = vmax.f32 %v349, 0.0
    %v400 = vmax.f32 %v352, 0.0
    %v401 = vmax.f32 %v357, 0.0
    %v402 = vmax.f32 %v360, 0.0
    %v403 = vmax.f32 %v365, 0.0
    %v404 = vmax.f32 %v368, 0.0
    %v405 = vmax.f32 %v373, 0.0
    %v406 = vmax.f32 %v376, 0.0
    %v407 = vmax.f32 %v381, 0.0
    %v408 = vmax.f32 %v384, 0.0
    %v409 = vmax.f32 %v389, 0.0
    %v410 = vmax.f32 %v392, 0.0
    %v411 = vld [vmem:[%s7] sm:$0xf]
    %v412 = vpack.c.bf16 %v396, %v395
    %v413 = vpack.c.bf16 %v398, %v397
    %v414 = vpack.c.bf16 %v400, %v399
    %v415 = vpack.c.bf16 %v402, %v401
    %v416 = vpack.c.bf16 %v404, %v403
    %v417 = vpack.c.bf16 %v406, %v405
    %v418 = vpack.c.bf16 %v408, %v407
    %v419 = vpack.c.bf16 %v410, %v409
    %v420 = vld [vmem:[%s8] sm:$0xff]
    %422 = vset.pattern.permute.xlu0 0
    %423 = vperm.xlu0 %422, %v420
    %v424 = vpop.permute.xlu0 %423
    %426 = vmatprep.subr.bf16.mxu0 0
    %427 = vmatpush1.bf16.msra.mxu0 %v412
    %428 = vmatprep.subr.bf16.mxu0 0
    %429 = vmatpush1.bf16.msra.mxu0 %v413
    %430 = vmatprep.subr.bf16.mxu0 0
    %431 = vmatpush1.bf16.msra.mxu0 %v414
    %432 = vmatprep.subr.bf16.mxu0 0
    %433 = vmatpush1.bf16.msra.mxu0 %v415
    %434 = vmatprep.subr.bf16.mxu0 0
    %435 = vmatpush1.bf16.msra.mxu0 %v416
    %436 = vmatprep.subr.bf16.mxu0 0
    %437 = vmatpush1.bf16.msra.mxu0 %v417
    %438 = vmatprep.subr.bf16.mxu0 0
    %439 = vmatpush1.bf16.msra.mxu0 %v418
    %440 = vmatprep.subr.bf16.mxu0 0
    %441 = vmatpush1.bf16.msra.mxu0 %v419
    %442 = vmatprep.subr.bf16.mxu0 0
    %443 = vmatpush1.bf16.msra.mxu0 0
    %444 = vmatprep.subr.bf16.mxu0 0
    %445 = vmatpush1.bf16.msra.mxu0 0
    %446 = vmatprep.subr.bf16.mxu0 0
    %447 = vmatpush1.bf16.msra.mxu0 0
    %448 = vmatprep.subr.bf16.mxu0 0
    %449 = vmatpush1.bf16.msra.mxu0 0
    %450 = vmatprep.subr.bf16.mxu0 0
    %451 = vmatpush1.bf16.msra.mxu0 0
    %452 = vmatprep.subr.bf16.mxu0 0
    %453 = vmatpush1.bf16.msra.mxu0 0
    %454 = vmatprep.subr.bf16.mxu0 0
    %455 = vmatpush1.bf16.msra.mxu0 0
    %456 = vmatprep.subr.bf16.mxu0 0
    %457 = vmatpush1.bf16.msra.mxu0 0
    %458 = vmatprep.mubr.bf16.mxu0 0
    %459 = vmatmul.mubr.bf16.gmra.mrb[0].mxu0 %v411
    %v460 = vpop.f32.mrb[0].mxu0
    %v461 = vadd.f32 %v424, %v460
    %v462 = vpop.f32.mrb[0].mxu0
    %v463 = vpop.f32.mrb[0].mxu0
    %v464 = vpop.f32.mrb[0].mxu0
    %465 = vdwg.mxu0
    %v466 = vlaneseq
    %v467 = vshrl.u32 %v466, 7
    %vm468 = vcmp.lt.s32.totalorder %v467, 8
    %v469 = vsel %vm468, %v461, -1e+30
    %v470 = vld [vmem:[%s2] sm:$0xf]
    %v471 = vunpack.c.l.bf16 %v470
    %v472 = vadd.f32 %v469, %v471
    %vm473 = vcmask 64512
    %v474 = vsel %vm473, %v472, -inf
    %v475 = vrot.slane %v474, 4
    %v476 = vmax.f32 %v474, %v475
    %v477 = vrot.slane %v476, 2
    %v478 = vmax.f32 %v476, %v477
    %v479 = vrot.slane %v478, 1
    %v480 = vmax.f32 %v478, %v479
    %vm481 = vcmp.eq.f32.partialorder %v472, %v480
    %v482 = vsel %vm481, %v467, 8
    %v483 = vsel %vm473, %v482, 2147483647
    %v484 = vrot.slane %v483, 4
    %vm485 = vcmp.lt.s32.totalorder %v483, %v484
    %v486 = vsel %vm485, %v483, %v484
    %v487 = vrot.slane %v486, 2
    %vm488 = vcmp.lt.s32.totalorder %v486, %v487
    %v489 = vsel %vm488, %v486, %v487
    %v490 = vrot.slane %v489, 1
    %vm491 = vcmp.lt.s32.totalorder %v489, %v490
    %v492 = vsel %vm491, %v489, %v490
    %v493 = vsel %vm473, %v469, -inf
    %v494 = vrot.slane %v493, 4
    %v495 = vmax.f32 %v493, %v494
    %v496 = vrot.slane %v495, 2
    %v497 = vmax.f32 %v495, %v496
    %v498 = vrot.slane %v497, 1
    %v499 = vmax.f32 %v497, %v498
    %v500 = vsub.f32 %v469, %v499
    %v501 = vmul.f32 %v500, 1.442695
    %v502 = vpow.pop %v501
    %v503 = vsel %vm473, %v502, 0.0
    %v504 = vrot.slane %v503, 4
    %v505 = vadd.f32 %v503, %v504
    %v506 = vrot.slane %v505, 2
    %v507 = vadd.f32 %v505, %v506
    %v508 = vrot.slane %v507, 1
    %v509 = vadd.f32 %v507, %v508
    %vm510 = vcmp.eq.s32.totalorder %v467, %v492
    %v511 = vsel %vm510, %v469, 0.0
    %v512 = vsel %vm473, %v511, 0.0
    %v513 = vrot.slane %v512, 4
    %v514 = vadd.f32 %v512, %v513
    %v515 = vrot.slane %v514, 2
    %v516 = vadd.f32 %v514, %v515
    %v517 = vrot.slane %v516, 1
    %v518 = vadd.f32 %v516, %v517
    %v519 = vsub.f32 %v518, %v499
    %v520 = vlog2.pop %v509
    %v521 = vmul.f32 %v520, 0.6931472
    %v522 = vsub.f32 %v519, %v521
    %vm523 = vcmask 57344
    %524 = vst.msk [vmem:[#allocation4] sm:$0x1] %vm523, %v492
    %525 = vst.msk [vmem:[#allocation6] sm:$0x1] %vm523, %v522
    // Predicated region
    $region34: #{tpu_custom_call.1} parent=1 // pred_check
      _
    $region35: #{tpu_custom_call.1} parent=1 // pred_check_branch
      %527 = sbr.rel (0) target = $region37
    $region36: #{tpu_custom_call.1} parent=1 // pred_region
      %s529 = ssub.s32 16, 16
      %530 = vsyncadd [#allocation5], %s529
      %s532 = sshll.u32 [#allocation4], 4
      %s533 = int_to_ptr.vmem [resolvable:$true] %s532
      %535 = dma.vmem_to_hbm [thread:$0]  %s533, 16, %s9, [#allocation5]
    $region37: #{tpu_custom_call.1} parent=1 // pred_fallthru
      _
    // Predicated region
    $region38: #{tpu_custom_call.1} parent=1 // pred_check
      _
    $region39: #{tpu_custom_call.1} parent=1 // pred_check_branch
      %537 = sbr.rel (0) target = $region41
    $region40: #{tpu_custom_call.1} parent=1 // pred_region
      %s539 = ssub.s32 16, 16
      %540 = vsyncadd [#allocation7], %s539
      %s542 = sshll.u32 [#allocation6], 4
      %s543 = int_to_ptr.vmem [resolvable:$true] %s542
      %545 = dma.vmem_to_hbm [thread:$0]  %s543, 16, %s10, [#allocation7]
    $region41: #{tpu_custom_call.1} parent=1 // pred_fallthru
      _
    // Predicated region
    $region42: #{tpu_custom_call.1} parent=1 // pred_check
      _
    $region43: #{tpu_custom_call.1} parent=1 // pred_check_branch
      %547 = sbr.rel (0) target = $region45
    $region44: #{tpu_custom_call.1} parent=1 // pred_region
      %548 = dma.done [#allocation5], 16
    $region45: #{tpu_custom_call.1} parent=1 // pred_fallthru
      _
    // Predicated region
    $region46: #{tpu_custom_call.1} parent=1 // pred_check
      _
    $region47: #{tpu_custom_call.1} parent=1 // pred_check_branch
      %550 = sbr.rel (0) target = $region49
    $region48: #{tpu_custom_call.1} parent=1 // pred_region
      %551 = dma.done [#allocation7], 16
    $region49: #{tpu_custom_call.1} parent=1 // pred_fallthru
      _
    %552 = vsyncpa [#allocation5], 1
    %553 = vsyncpa [#allocation7], 1

</llo_original>
